<compile_context>
chip_gen: v5e
topology: v5e:2x2
jax: 0.10.0
libtpu: 0.0.40
codegen_flags: <defaults>
</compile_context>

<pallas_src>
import jax
import jax.numpy as jnp
from jax import lax
from jax.experimental import pallas as pl
from jax.experimental.pallas import tpu as pltpu


def lstm_kernel(x_ref, wih_t_ref, whh_t_ref, b_ref, h0_ref, c0_ref,
                out_ref, hn_ref, cn_ref, gx_ref):
    # x_ref    : (T*B, F)   time-major input, flattened to a 2-D slab
    # wih_t_ref: (F, 4H)    input->gates weight (transposed; PyTorch gate order i,f,g,o)
    # whh_t_ref: (H, 4H)    hidden->gates weight (transposed)
    # b_ref    : (1, 4H)    bias_ih + bias_hh (fused)
    # h0_ref   : (B, H)     initial hidden state
    # c0_ref   : (B, H)     initial cell state
    # out_ref  : (T*B, H)   per-step hidden outputs
    # hn_ref   : (B, H)     final hidden state
    # cn_ref   : (B, H)     final cell state
    # gx_ref   : (T*B, 4H)  VMEM scratch holding the batched input projection
    TB = x_ref.shape[0]
    B, H = h0_ref.shape
    T = TB // B

    # One big MXU matmul for the input projection of all timesteps at once,
    # bias fused in.  Gate layout along the 128-lane axis: [i | f | g | o].
    gx_ref[...] = (
        jnp.dot(x_ref[...], wih_t_ref[...], preferred_element_type=jnp.float32)
        + b_ref[...])

    def step(t, carry):
        h, c = carry
        row = pl.multiple_of(t * B, B)
        gates = gx_ref[pl.ds(row, B), :] + jnp.dot(
            h, whh_t_ref[...], preferred_element_type=jnp.float32)     # (B, 4H)
        i = jax.nn.sigmoid(gates[:, 0 * H:1 * H])
        f = jax.nn.sigmoid(gates[:, 1 * H:2 * H])
        g = jnp.tanh(gates[:, 2 * H:3 * H])
        o = jax.nn.sigmoid(gates[:, 3 * H:4 * H])
        c_new = f * c + i * g
        h_new = o * jnp.tanh(c_new)
        out_ref[pl.ds(row, B), :] = h_new.astype(out_ref.dtype)
        return (h_new, c_new)

    h, c = lax.fori_loop(
        0, T, step,
        (h0_ref[...].astype(jnp.float32), c0_ref[...].astype(jnp.float32)))
    hn_ref[...] = h.astype(hn_ref.dtype)
    cn_ref[...] = c.astype(cn_ref.dtype)


def base_rnn_forward(x_t, hidden, w_ih, w_hh, b_ih, b_hh):
    """BaseRNN.forward for the default LSTM cell.

    x_t    : (T, B, F)  time-major input (PyTorch nn.LSTM default layout)
    hidden : (h0, c0), each (1, B, H)
    w_ih   : (4H, F), w_hh: (4H, H), b_ih/b_hh: (4H,)   PyTorch parameter shapes
    returns: (output (T, B, H), (h_n (1, B, H), c_n (1, B, H)))
    """
    T, B, F = x_t.shape
    h0, c0 = hidden
    H = h0.shape[-1]

    wih_t = jnp.transpose(w_ih)                 # (F, 4H)
    whh_t = jnp.transpose(w_hh)                 # (H, 4H)
    bias = (b_ih + b_hh).reshape(1, 4 * H)      # fused bias
    x2d = x_t.reshape(T * B, F)                 # lane/sublane-dense input slab

    out2d, hn, cn = pl.pallas_call(
        lstm_kernel,
        out_shape=(
            jax.ShapeDtypeStruct((T * B, H), x_t.dtype),
            jax.ShapeDtypeStruct((B, H), x_t.dtype),
            jax.ShapeDtypeStruct((B, H), x_t.dtype),
        ),
        grid_spec=pltpu.PrefetchScalarGridSpec(
            num_scalar_prefetch=0,
            grid=(1,),
            in_specs=[
                pl.BlockSpec((T * B, F), lambda b: (0, 0)),
                pl.BlockSpec((F, 4 * H), lambda b: (0, 0)),
                pl.BlockSpec((H, 4 * H), lambda b: (0, 0)),
                pl.BlockSpec((1, 4 * H), lambda b: (0, 0)),
                pl.BlockSpec((B, H), lambda b: (0, 0)),
                pl.BlockSpec((B, H), lambda b: (0, 0)),
            ],
            out_specs=[
                pl.BlockSpec((T * B, H), lambda b: (0, 0)),
                pl.BlockSpec((B, H), lambda b: (0, 0)),
                pl.BlockSpec((B, H), lambda b: (0, 0)),
            ],
            scratch_shapes=[pltpu.VMEM((T * B, 4 * H), jnp.float32)],
        ),
        compiler_params=pltpu.CompilerParams(
            dimension_semantics=("arbitrary",)),
    )(x2d, wih_t, whh_t, bias, h0[0], c0[0])

    return out2d.reshape(T, B, H), (hn[None], cn[None])


def base_rnn_ref(x_t, hidden, w_ih, w_hh, b_ih, b_hh):
    """Pure-JAX reference mirroring PyTorch nn.LSTM (gate order i, f, g, o)."""
    h0, c0 = hidden

    def step(carry, x):
        h, c = carry
        gates = x @ w_ih.T + b_ih + h @ w_hh.T + b_hh
        i, f, g, o = jnp.split(gates, 4, axis=-1)
        i = jax.nn.sigmoid(i)
        f = jax.nn.sigmoid(f)
        g = jnp.tanh(g)
        o = jax.nn.sigmoid(o)
        c = f * c + i * g
        h = o * jnp.tanh(c)
        return (h, c), h

    (hn, cn), ys = lax.scan(step, (h0[0], c0[0]), x_t)
    return ys, (hn[None], cn[None])


if __name__ == "__main__":
    T, B, F, H = 8, 4, 16, 32   # seq_len, batch, N_FEATURES, HIDDEN_DIM

    key = jax.random.PRNGKey(0)
    kx, kh, kc, k1, k2, k3, k4 = jax.random.split(key, 7)
    x_t = jax.random.normal(kx, (T, B, F), jnp.float32)
    h0 = jax.random.normal(kh, (1, B, H), jnp.float32)
    c0 = jax.random.normal(kc, (1, B, H), jnp.float32)
    scale = 1.0 / jnp.sqrt(H)
    w_ih = jax.random.uniform(k1, (4 * H, F), jnp.float32, -scale, scale)
    w_hh = jax.random.uniform(k2, (4 * H, H), jnp.float32, -scale, scale)
    b_ih = jax.random.uniform(k3, (4 * H,), jnp.float32, -scale, scale)
    b_hh = jax.random.uniform(k4, (4 * H,), jnp.float32, -scale, scale)

    out, (hn, cn) = base_rnn_forward(x_t, (h0, c0), w_ih, w_hh, b_ih, b_hh)
    out = jax.block_until_ready(out)
    hn = jax.block_until_ready(hn)
    cn = jax.block_until_ready(cn)

    out_r, (hn_r, cn_r) = base_rnn_ref(x_t, (h0, c0), w_ih, w_hh, b_ih, b_hh)

    assert out.shape == (T, B, H) and hn.shape == (1, B, H) and cn.shape == (1, B, H)
    for got, want, name in ((out, out_r, "output"), (hn, hn_r, "h_n"), (cn, cn_r, "c_n")):
        err = float(jnp.max(jnp.abs(got - want)))
        assert jnp.allclose(got, want, atol=1e-4, rtol=1e-4), f"{name} max abs err = {err}"
    print("KERNEL_OK")
</pallas_src>

<mosaic_0001>
module attributes {stable_mosaic.version = 11 : i64} {
  func.func @lstm_kernel(%arg0: i32, %arg1: memref<32x16xf32, #tpu.memory_space<vmem>>, %arg2: memref<16x128xf32, #tpu.memory_space<vmem>>, %arg3: memref<32x128xf32, #tpu.memory_space<vmem>>, %arg4: memref<1x128xf32, #tpu.memory_space<vmem>>, %arg5: memref<4x32xf32, #tpu.memory_space<vmem>>, %arg6: memref<4x32xf32, #tpu.memory_space<vmem>>, %arg7: memref<32x32xf32, #tpu.memory_space<vmem>>, %arg8: memref<4x32xf32, #tpu.memory_space<vmem>>, %arg9: memref<4x32xf32, #tpu.memory_space<vmem>>, %arg10: memref<32x128xf32, #tpu.memory_space<vmem>>) attributes {dimension_semantics = [#tpu.dimension_semantics<arbitrary>], iteration_bounds = array<i64: 1>, scalar_prefetch = 0 : i64, scratch_operands = 1 : i64, tpu.core_type = #tpu.core_type<tc>, window_params = [{pipeline_mode = #tpu.pipeline_mode<synchronous>, transform_indices = @transform_0, window_bounds = array<i64: 32, 16>}, {pipeline_mode = #tpu.pipeline_mode<synchronous>, transform_indices = @transform_1, window_bounds = array<i64: 16, 128>}, {pipeline_mode = #tpu.pipeline_mode<synchronous>, transform_indices = @transform_2, window_bounds = array<i64: 32, 128>}, {pipeline_mode = #tpu.pipeline_mode<synchronous>, transform_indices = @transform_3, window_bounds = array<i64: 1, 128>}, {pipeline_mode = #tpu.pipeline_mode<synchronous>, transform_indices = @transform_4, window_bounds = array<i64: 4, 32>}, {pipeline_mode = #tpu.pipeline_mode<synchronous>, transform_indices = @transform_5, window_bounds = array<i64: 4, 32>}, {pipeline_mode = #tpu.pipeline_mode<synchronous>, transform_indices = @transform_6, window_bounds = array<i64: 32, 32>}, {pipeline_mode = #tpu.pipeline_mode<synchronous>, transform_indices = @transform_7, window_bounds = array<i64: 4, 32>}, {pipeline_mode = #tpu.pipeline_mode<synchronous>, transform_indices = @transform_8, window_bounds = array<i64: 4, 32>}]} {
    %c0 = arith.constant 0 : index
    %c0_0 = arith.constant 0 : index
    %0 = vector.load %arg1[%c0, %c0_0] : memref<32x16xf32, #tpu.memory_space<vmem>>, vector<32x16xf32>
    %c0_1 = arith.constant 0 : index
    %c0_2 = arith.constant 0 : index
    %1 = vector.load %arg2[%c0_1, %c0_2] : memref<16x128xf32, #tpu.memory_space<vmem>>, vector<16x128xf32>
    %cst = arith.constant dense<0.000000e+00> : vector<32x128xf32>
    %2 = tpu.matmul %0, %1, %cst {dimension_numbers = #tpu.dot_dimension_numbers<[1], [0], [0], [1], [0, 0, 1, 1], [], []>} : vector<32x16xf32>, vector<16x128xf32>, vector<32x128xf32> -> vector<32x128xf32>
    %c0_3 = arith.constant 0 : index
    %c0_4 = arith.constant 0 : index
    %3 = vector.load %arg4[%c0_3, %c0_4] : memref<1x128xf32, #tpu.memory_space<vmem>>, vector<1x128xf32>
    %4 = vector.broadcast %3 : vector<1x128xf32> to vector<32x128xf32>
    %5 = arith.addf %2, %4 : vector<32x128xf32>
    %c0_5 = arith.constant 0 : index
    %c0_6 = arith.constant 0 : index
    %6 = vector.load %arg10[%c0_5, %c0_6] : memref<32x128xf32, #tpu.memory_space<vmem>>, vector<32x128xf32>
    tpu.vector_store %arg10[%c0_5, %c0_6], %5 {strides = array<i32>} : memref<32x128xf32, #tpu.memory_space<vmem>>, vector<32x128xf32>,
    %c0_7 = arith.constant 0 : index
    %c0_8 = arith.constant 0 : index
    %7 = vector.load %arg5[%c0_7, %c0_8] : memref<4x32xf32, #tpu.memory_space<vmem>>, vector<4x32xf32>
    %c0_9 = arith.constant 0 : index
    %c0_10 = arith.constant 0 : index
    %8 = vector.load %arg6[%c0_9, %c0_10] : memref<4x32xf32, #tpu.memory_space<vmem>>, vector<4x32xf32>
    %c0_i32 = arith.constant 0 : i32
    %c8_i32 = arith.constant 8 : i32
    %9 = arith.addi %c0_i32, %c8_i32 : i32
    %c1_i32 = arith.constant 1 : i32
    %10:2 = scf.for %arg11 = %c0_i32 to %9 step %c1_i32 iter_args(%arg12 = %7, %arg13 = %8) -> (vector<4x32xf32>, vector<4x32xf32>)  : i32 {
      %c4_i32 = arith.constant 4 : i32
      %13 = arith.muli %arg11, %c4_i32 : i32
      %14 = tpu.assume_multiple %13, 4 : i32
      %15 = arith.index_cast %14 : i32 to index
      %c0_16 = arith.constant 0 : index
      %16 = vector.load %arg10[%15, %c0_16] : memref<32x128xf32, #tpu.memory_space<vmem>>, vector<4x128xf32>
      %c0_17 = arith.constant 0 : index
      %c0_18 = arith.constant 0 : index
      %17 = vector.load %arg3[%c0_17, %c0_18] : memref<32x128xf32, #tpu.memory_space<vmem>>, vector<32x128xf32>
      %cst_19 = arith.constant dense<0.000000e+00> : vector<4x128xf32>
      %18 = tpu.matmul %arg12, %17, %cst_19 {dimension_numbers = #tpu.dot_dimension_numbers<[1], [0], [0], [1], [0, 0, 1, 1], [], []>} : vector<4x32xf32>, vector<32x128xf32>, vector<4x128xf32> -> vector<4x128xf32>
      %19 = arith.addf %16, %18 : vector<4x128xf32>
      %20 = vector.extract_strided_slice %19 {offsets = [0, 0], sizes = [4, 32], strides = [1, 1]} : vector<4x128xf32> to vector<4x32xf32>
      %21 = arith.negf %20 : vector<4x32xf32>
      %22 = math.exp %21 : vector<4x32xf32>
      %cst_20 = arith.constant 1.000000e+00 : f32
      %23 = vector.broadcast %cst_20 : f32 to vector<4x32xf32>
      %24 = arith.addf %23, %22 : vector<4x32xf32>
      %25 = arith.divf %23, %24 : vector<4x32xf32>
      %26 = vector.extract_strided_slice %19 {offsets = [0, 32], sizes = [4, 32], strides = [1, 1]} : vector<4x128xf32> to vector<4x32xf32>
      %27 = arith.negf %26 : vector<4x32xf32>
      %28 = math.exp %27 : vector<4x32xf32>
      %cst_21 = arith.constant 1.000000e+00 : f32
      %29 = vector.broadcast %cst_21 : f32 to vector<4x32xf32>
      %30 = arith.addf %29, %28 : vector<4x32xf32>
      %31 = arith.divf %29, %30 : vector<4x32xf32>
      %32 = vector.extract_strided_slice %19 {offsets = [0, 64], sizes = [4, 32], strides = [1, 1]} : vector<4x128xf32> to vector<4x32xf32>
      %33 = math.tanh %32 : vector<4x32xf32>
      %34 = vector.extract_strided_slice %19 {offsets = [0, 96], sizes = [4, 32], strides = [1, 1]} : vector<4x128xf32> to vector<4x32xf32>
      %35 = arith.negf %34 : vector<4x32xf32>
      %36 = math.exp %35 : vector<4x32xf32>
      %cst_22 = arith.constant 1.000000e+00 : f32
      %37 = vector.broadcast %cst_22 : f32 to vector<4x32xf32>
      %38 = arith.addf %37, %36 : vector<4x32xf32>
      %39 = arith.divf %37, %38 : vector<4x32xf32>
      %40 = arith.mulf %31, %arg13 : vector<4x32xf32>
      %41 = arith.mulf %25, %33 : vector<4x32xf32>
      %42 = arith.addf %40, %41 : vector<4x32xf32>
      %43 = math.tanh %42 : vector<4x32xf32>
      %44 = arith.mulf %39, %43 : vector<4x32xf32>
      %45 = arith.index_cast %14 : i32 to index
      %c0_23 = arith.constant 0 : index
      %46 = vector.load %arg7[%45, %c0_23] : memref<32x32xf32, #tpu.memory_space<vmem>>, vector<4x32xf32>
      tpu.vector_store %arg7[%45, %c0_23], %44 {strides = array<i32>} : memref<32x32xf32, #tpu.memory_space<vmem>>, vector<4x32xf32>,
      scf.yield %44, %42 : vector<4x32xf32>, vector<4x32xf32>
    }
    %c8_i32_11 = arith.constant 8 : i32
    %c0_12 = arith.constant 0 : index
    %c0_13 = arith.constant 0 : index
    %11 = vector.load %arg8[%c0_12, %c0_13] : memref<4x32xf32, #tpu.memory_space<vmem>>, vector<4x32xf32>
    tpu.vector_store %arg8[%c0_12, %c0_13], %10#0 {strides = array<i32>} : memref<4x32xf32, #tpu.memory_space<vmem>>, vector<4x32xf32>,
    %c0_14 = arith.constant 0 : index
    %c0_15 = arith.constant 0 : index
    %12 = vector.load %arg9[%c0_14, %c0_15] : memref<4x32xf32, #tpu.memory_space<vmem>>, vector<4x32xf32>
    tpu.vector_store %arg9[%c0_14, %c0_15], %10#1 {strides = array<i32>} : memref<4x32xf32, #tpu.memory_space<vmem>>, vector<4x32xf32>,
    return
  }
  func.func @transform_0(%arg0: i32) -> (i32, i32) {
    %c0_i32 = arith.constant 0 : i32
    %c0_i32_0 = arith.constant 0 : i32
    %c0_i32_1 = arith.constant 0 : i32
    return %c0_i32, %c0_i32_0 : i32, i32
  }
  func.func @transform_1(%arg0: i32) -> (i32, i32) {
    %c0_i32 = arith.constant 0 : i32
    %c0_i32_0 = arith.constant 0 : i32
    %c0_i32_1 = arith.constant 0 : i32
    return %c0_i32, %c0_i32_0 : i32, i32
  }
  func.func @transform_2(%arg0: i32) -> (i32, i32) {
    %c0_i32 = arith.constant 0 : i32
    %c0_i32_0 = arith.constant 0 : i32
    %c0_i32_1 = arith.constant 0 : i32
    return %c0_i32, %c0_i32_0 : i32, i32
  }
  func.func @transform_3(%arg0: i32) -> (i32, i32) {
    %c0_i32 = arith.constant 0 : i32
    %c0_i32_0 = arith.constant 0 : i32
    %c0_i32_1 = arith.constant 0 : i32
    return %c0_i32, %c0_i32_0 : i32, i32
  }
  func.func @transform_4(%arg0: i32) -> (i32, i32) {
    %c0_i32 = arith.constant 0 : i32
    %c0_i32_0 = arith.constant 0 : i32
    %c0_i32_1 = arith.constant 0 : i32
    return %c0_i32, %c0_i32_0 : i32, i32
  }
  func.func @transform_5(%arg0: i32) -> (i32, i32) {
    %c0_i32 = arith.constant 0 : i32
    %c0_i32_0 = arith.constant 0 : i32
    %c0_i32_1 = arith.constant 0 : i32
    return %c0_i32, %c0_i32_0 : i32, i32
  }
  func.func @transform_6(%arg0: i32) -> (i32, i32) {
    %c0_i32 = arith.constant 0 : i32
    %c0_i32_0 = arith.constant 0 : i32
    %c0_i32_1 = arith.constant 0 : i32
    return %c0_i32, %c0_i32_0 : i32, i32
  }
  func.func @transform_7(%arg0: i32) -> (i32, i32) {
    %c0_i32 = arith.constant 0 : i32
    %c0_i32_0 = arith.constant 0 : i32
    %c0_i32_1 = arith.constant 0 : i32
    return %c0_i32, %c0_i32_0 : i32, i32
  }
  func.func @transform_8(%arg0: i32) -> (i32, i32) {
    %c0_i32 = arith.constant 0 : i32
    %c0_i32_0 = arith.constant 0 : i32
    %c0_i32_1 = arith.constant 0 : i32
    return %c0_i32, %c0_i32_0 : i32, i32
  }
}

</mosaic_0001>

<llo_original>
// kernel: tpu_custom_call.1
$region0: #{tpu_custom_call.1}
  #allocation0 [shape = 'u32[]', space=smem, size = 0x4, offset = 0x4, fixed_abs, tag = 'smem constant byte address 0x4 - core index']
  #allocation1 [shape = 'u32[72,128]{1,0:T(1,128)}', space=vmem, size = 0x9000, scoped, tag = 'internal scratch']
  #allocation2 [shape = 'f32[32,128]{1,0:T(8,128)}', space=vmem, size = 0x4000, scoped, tag = 'scratch operand']
  %s0 = inlined_call_operand.vmem [shape: f32[32,16], index: 0, kind: input, shape index: {}]
  %s1 = inlined_call_operand.vmem [shape: f32[16,128], index: 1, kind: input, shape index: {}]
  %s2 = inlined_call_operand.vmem [shape: f32[32,128], index: 2, kind: input, shape index: {}]
  %s3 = inlined_call_operand.hbm [shape: f32[1,128], index: 3, kind: input, shape index: {}]
  %s4 = inlined_call_operand.hbm [shape: f32[4,32], index: 4, kind: input, shape index: {}]
  %s5 = inlined_call_operand.vmem [shape: f32[4,32], index: 5, kind: input, shape index: {}]
  %s6 = inlined_call_operand.hbm [shape: f32[32,32], index: 6, kind: output, shape index: {0}]
  %s7 = inlined_call_operand.hbm [shape: f32[4,32], index: 7, kind: output, shape index: {1}]
  %s8 = inlined_call_operand.hbm [shape: f32[4,32], index: 8, kind: output, shape index: {2}]
  %9 = xla_tuple %s6, %s7, %s8
  %s10 = sld [smem:[#allocation0]]
  $region65: #{tpu_custom_call.1} parent=0
    _
  %s12 = ssub.s32 1, %s10
  %s13 = scalar_select 0, %s12, %s10
  $region1: #{tpu_custom_call.1} parent=0
    #allocation3 [shape = 'u8[512]{0}', space=vmem, size = 0x400, scoped, tag = 'input window, operand 3, single buffered']
    #allocation4 [shape = 's32[1]{0}', space=sflag, size = 0x4, scoped, tag = 'scoped memory for tpu_custom_call.1']
    #allocation5 [shape = 's32[1]{0}', space=sflag, size = 0x4, scoped, tag = 'scoped memory for tpu_custom_call.1']
    #allocation6 [shape = 'u8[2048]{0}', space=vmem, size = 0x800, scoped, tag = 'input window, operand 4, single buffered']
    #allocation7 [shape = 's32[1]{0}', space=sflag, size = 0x4, scoped, tag = 'scoped memory for tpu_custom_call.1']
    #allocation8 [shape = 'u8[16384]{0}', space=vmem, size = 0x4000, scoped, tag = 'output window, operand 0, single buffered']
    #allocation9 [shape = 'u8[2048]{0}', space=vmem, size = 0x800, scoped, tag = 'output window, operand 1, single buffered']
    #allocation10 [shape = 's32[1]{0}', space=sflag, size = 0x4, scoped, tag = 'scoped memory for tpu_custom_call.1']
    #allocation11 [shape = 'u8[2048]{0}', space=vmem, size = 0x800, scoped, tag = 'output window, operand 2, single buffered']
    %14 = vsyncpa [#allocation4], 0
    %15 = vsyncpa [#allocation7], 0
    %16 = vsyncpa [#allocation5], 0
    %17 = vsyncpa [#allocation10], 0
    // Predicated region
    $region2: #{tpu_custom_call.1} parent=1 // pred_check
      _
    $region3: #{tpu_custom_call.1} parent=1 // pred_check_branch
      %19 = sbr.rel (0) target = $region5
    $region4: #{tpu_custom_call.1} parent=1 // pred_region
      _
    $region5: #{tpu_custom_call.1} parent=1 // pred_fallthru
      _
    // Predicated region
    $region6: #{tpu_custom_call.1} parent=1 // pred_check
      _
    $region7: #{tpu_custom_call.1} parent=1 // pred_check_branch
      %21 = sbr.rel (0) target = $region9
    $region8: #{tpu_custom_call.1} parent=1 // pred_region
      _
    $region9: #{tpu_custom_call.1} parent=1 // pred_fallthru
      _
    // Predicated region
    $region10: #{tpu_custom_call.1} parent=1 // pred_check
      _
    $region11: #{tpu_custom_call.1} parent=1 // pred_check_branch
      %23 = sbr.rel (0) target = $region13
    $region12: #{tpu_custom_call.1} parent=1 // pred_region
      _
    $region13: #{tpu_custom_call.1} parent=1 // pred_fallthru
      _
    // Predicated region
    $region14: #{tpu_custom_call.1} parent=1 // pred_check
      _
    $region15: #{tpu_custom_call.1} parent=1 // pred_check_branch
      %25 = sbr.rel (0) target = $region17
    $region16: #{tpu_custom_call.1} parent=1 // pred_region
      %27 = vsyncadd [#allocation4], 0
      %s29 = sshll.u32 %s3, 4
      %s30 = int_to_ptr.hbm [resolvable:$true] %s29
      %s31 = sshll.u32 [#allocation3], 4
      %s32 = int_to_ptr.vmem [resolvable:$true] %s31
      %34 = dma.hbm_to_vmem [thread:$0]  %s30, 16, %s32, [#allocation4]
    $region17: #{tpu_custom_call.1} parent=1 // pred_fallthru
      _
    // Predicated region
    $region18: #{tpu_custom_call.1} parent=1 // pred_check
      _
    $region19: #{tpu_custom_call.1} parent=1 // pred_check_branch
      %36 = sbr.rel (0) target = $region21
    $region20: #{tpu_custom_call.1} parent=1 // pred_region
      %38 = vsyncadd [#allocation7], 0
      %s40 = sshll.u32 %s4, 4
      %s41 = int_to_ptr.hbm [resolvable:$true] %s40
      %s42 = sshll.u32 [#allocation6], 4
      %s43 = int_to_ptr.vmem [resolvable:$true] %s42
      %45 = dma.hbm_to_vmem [thread:$0]  %s41, 64, %s43, [#allocation7]
    $region21: #{tpu_custom_call.1} parent=1 // pred_fallthru
      _
    // Predicated region
    $region22: #{tpu_custom_call.1} parent=1 // pred_check
      _
    $region23: #{tpu_custom_call.1} parent=1 // pred_check_branch
      %47 = sbr.rel (0) target = $region25
    $region24: #{tpu_custom_call.1} parent=1 // pred_region
      _
    $region25: #{tpu_custom_call.1} parent=1 // pred_fallthru
      _
    // Predicated region
    $region26: #{tpu_custom_call.1} parent=1 // pred_check
      _
    $region27: #{tpu_custom_call.1} parent=1 // pred_check_branch
      %49 = sbr.rel (0) target = $region29
    $region28: #{tpu_custom_call.1} parent=1 // pred_region
      %51 = dma.done [#allocation4], 16
    $region29: #{tpu_custom_call.1} parent=1 // pred_fallthru
      _
    // Predicated region
    $region30: #{tpu_custom_call.1} parent=1 // pred_check
      _
    $region31: #{tpu_custom_call.1} parent=1 // pred_check_branch
      %53 = sbr.rel (0) target = $region33
    $region32: #{tpu_custom_call.1} parent=1 // pred_region
      %55 = dma.done [#allocation7], 64
    $region33: #{tpu_custom_call.1} parent=1 // pred_fallthru
      _
    %v56 = vld [vmem:[%s0] sm:$0xff]
    %v57 = vld [vmem:[%s0 + $0x8] sm:$0xff]
    %v58 = vld [vmem:[%s0 + $0x10] sm:$0xff]
    %v59 = vld [vmem:[%s0 + $0x18] sm:$0xff]
    %v60 = vld [vmem:[%s1] sm:$0xff]
    %v61 = vld [vmem:[%s1 + $0x8] sm:$0xff]
    %v62 = vld [vmem:[#allocation3] sm:$0x1]
    %v64 = vperm.slane %v62, 0
    %vm66 = vcmask 130048
    %v68 = vsel %vm66, %v56, 0
    %v71 = vsel %vm66, %v57, 0
    %v74 = vsel %vm66, %v58, 0
    %v77 = vsel %vm66, %v59, 0
    %79 = vmatpush.msra.mxu0 0.0
    %80 = vmatpush.msra.mxu0 0.0
    %81 = vmatpush.msra.mxu0 0.0
    %82 = vmatpush.msra.mxu0 0.0
    %83 = vmatpush.msra.mxu0 0.0
    %84 = vmatpush.msra.mxu0 0.0
    %85 = vmatpush.msra.mxu0 0.0
    %86 = vmatpush.msra.mxu0 0.0
    %87 = vmatpush.msra.mxu0 0.0
    %88 = vmatpush.msra.mxu0 0.0
    %89 = vmatpush.msra.mxu0 0.0
    %90 = vmatpush.msra.mxu0 0.0
    %91 = vmatpush.msra.mxu0 0.0
    %92 = vmatpush.msra.mxu0 0.0
    %93 = vmatpush.msra.mxu0 %v61
    %94 = vmatpush.msra.mxu0 %v60
    %95 = vmatmul.f32.gmra.mxu0 %v68
    %v96 = vpop.f32.mrf.mxu0
    %v97 = vadd.f32 %v64, %v96
    %98 = vmatmul.f32.gmra.mxu0 %v71
    %v99 = vpop.f32.mrf.mxu0
    %v100 = vadd.f32 %v64, %v99
    %101 = vmatmul.f32.gmra.mxu0 %v74
    %v102 = vpop.f32.mrf.mxu0
    %v103 = vadd.f32 %v64, %v102
    %104 = vmatmul.f32.gmra.mxu0 %v77
    %v105 = vpop.f32.mrf.mxu0
    %v106 = vadd.f32 %v64, %v105
    %107 = vdwg.mxu0
    %108 = vst [vmem:[#allocation2] sm:$0xff] %v97
    %109 = vst [vmem:[#allocation2 + $0x8] sm:$0xff] %v100
    %110 = vst [vmem:[#allocation2 + $0x10] sm:$0xff] %v103
    %111 = vst [vmem:[#allocation2 + $0x18] sm:$0xff] %v106
    %v112 = vld [vmem:[#allocation6] sm:$0xf]
    %v113 = vld [vmem:[%s5] sm:$0xf]
    loop: start=0, step=1, limit=8
    $region34: #{tpu_custom_call.1} parent=1 // loop_pre_header
      _
    $region35: #{tpu_custom_call.1} parent=1 // loop_header
      %s115 = sphi 0, %s119
      %p116 = scmp.ge.s32.totalorder %s115, 8
      %v120 = vphi %v112, %v197
      %v121 = vphi %v113, %v204
    $region36: #{tpu_custom_call.1} parent=1 // loop_header_branch
      %118 = sbr.rel (%p116) target = $region40
    $region37: #{tpu_custom_call.1} parent=1 // loop_body
      %s122 = smul.u32 %s115, 4
      %s123 = scalar_lea.vmem [#allocation2], %s122
      %v124 = vld [vmem:[%s123] sm:$0xf]
      %v125 = vld [vmem:[%s2] sm:$0xff]
      %v126 = vld [vmem:[%s2 + $0x8] sm:$0xff]
      %v127 = vld [vmem:[%s2 + $0x10] sm:$0xff]
      %v128 = vld [vmem:[%s2 + $0x18] sm:$0xff]
      %vm129 = vcmask 261120
      %v131 = vsel %vm129, %v120, 0
      %133 = vmatpush.msra.mxu0 0.0
      %134 = vmatpush.msra.mxu0 0.0
      %135 = vmatpush.msra.mxu0 0.0
      %136 = vmatpush.msra.mxu0 0.0
      %137 = vmatpush.msra.mxu0 0.0
      %138 = vmatpush.msra.mxu0 0.0
      %139 = vmatpush.msra.mxu0 0.0
      %140 = vmatpush.msra.mxu0 0.0
      %141 = vmatpush.msra.mxu0 0.0
      %142 = vmatpush.msra.mxu0 0.0
      %143 = vmatpush.msra.mxu0 0.0
      %144 = vmatpush.msra.mxu0 0.0
      %145 = vmatpush.msra.mxu0 %v128
      %146 = vmatpush.msra.mxu0 %v127
      %147 = vmatpush.msra.mxu0 %v126
      %148 = vmatpush.msra.mxu0 %v125
      %149 = vmatmul.f32.gmra.mxu0 %v131
      %v150 = vpop.f32.mrf.mxu0
      %v151 = vadd.f32 0.0, %v150
      %152 = vdwg.mxu0
      %v153 = vadd.f32 %v124, %v151
      %v154 = vxor.u32 %v153, 2147483648
      %v155 = vmul.f32 %v154, 1.442695
      %v156 = vpow.pop %v155
      %v157 = vadd.f32 %v156, 1.0
      %v158 = vrcp.pop %v157
      %v159 = vmul.f32 %v157, %v158
      %v160 = vsub.f32 1.0, %v159
      %v161 = vmul.f32 %v158, %v160
      %v162 = vadd.f32 %v158, %v161
      %vm163 = vweird.f32 %v157
      %vm164 = vweird.f32 %v158
      %vm165 = vmor %vm163, %vm164
      %v166 = vsel %vm165, %v158, %v162
      %v167 = vand.u32 2147483647, %v157
      %vm168 = vcmp.eq.f32.partialorder %v167, 8.507059e+37
      %v169 = vand.u32 %v157, 2147483648
      %v170 = vor.u32 1.1754944e-38, %v169
      %v171 = vsel %vm168, %v170, %v166
      %v172 = vmul.f32 1.0, %v171
      %v173 = vtanh.pop %v153
      %175 = vrot.lane.b32.xlu0 %v121, 32
      %v176 = vpop.permute.xlu0 %175
      %v178 = vmul.f32 %v172, %v176
      %180 = vrot.lane.b32.xlu0 %v173, 64
      %v181 = vpop.permute.xlu0 %180
      %v183 = vmul.f32 %v172, %v181
      %185 = vrot.lane.b32.xlu0 %v183, 32
      %v186 = vpop.permute.xlu0 %185
      %v188 = vadd.f32 %v178, %v186
      %v189 = vtanh.pop %v188
      %191 = vrot.lane.b32.xlu0 %v189, 64
      %v192 = vpop.permute.xlu0 %191
      %v194 = vmul.f32 %v172, %v192
      %196 = vrot.lane.b32.xlu0 %v194, 32
      %v197 = vpop.permute.xlu0 %196
      %s199 = scalar_lea.vmem [#allocation8], %s122
      %vm200 = vcmask 257024
      %201 = vst.msk [vmem:[%s199] sm:$0xf] %vm200, %v197
      %203 = vrot.lane.b32.xlu0 %v188, 96
      %v204 = vpop.permute.xlu0 %203
    $region38: #{tpu_custom_call.1} parent=1 // loop_footer
      %s119 = sadd.s32 1, %s115
    $region39: #{tpu_custom_call.1} parent=1 // loop_footer_branch
      %114 = sbr.rel target = $region35
    $region40: #{tpu_custom_call.1} parent=1 // loop_exit
      _
    %vm206 = vcmask 257024
    %207 = vst.msk [vmem:[#allocation9] sm:$0xf] %vm206, %v120
    %208 = vst.msk [vmem:[#allocation11] sm:$0xf] %vm206, %v121
    // Predicated region
    $region41: #{tpu_custom_call.1} parent=1 // pred_check
      _
    $region42: #{tpu_custom_call.1} parent=1 // pred_check_branch
      %210 = sbr.rel (0) target = $region44
    $region43: #{tpu_custom_call.1} parent=1 // pred_region
      %212 = vsyncadd [#allocation5], 0
      %s213 = sshll.u32 [#allocation8], 4
      %s214 = int_to_ptr.vmem [resolvable:$true] %s213
      %s215 = sshll.u32 %s6, 4
      %s216 = int_to_ptr.hbm [resolvable:$true] %s215
      %221 = dma.vmem_to_hbm [thread:$0]  %s214, 512, %s216, [#allocation5], 128, 128, 8
    $region44: #{tpu_custom_call.1} parent=1 // pred_fallthru
      _
    // Predicated region
    $region45: #{tpu_custom_call.1} parent=1 // pred_check
      _
    $region46: #{tpu_custom_call.1} parent=1 // pred_check_branch
      %223 = sbr.rel (0) target = $region48
    $region47: #{tpu_custom_call.1} parent=1 // pred_region
      %225 = vsyncadd [#allocation10], 0
      %s227 = sshll.u32 [#allocation9], 4
      %s228 = int_to_ptr.vmem [resolvable:$true] %s227
      %s229 = sshll.u32 %s7, 4
      %s230 = int_to_ptr.hbm [resolvable:$true] %s229
      %232 = dma.vmem_to_hbm [thread:$0]  %s228, 64, %s230, [#allocation10]
    $region48: #{tpu_custom_call.1} parent=1 // pred_fallthru
      _
    // Predicated region
    $region49: #{tpu_custom_call.1} parent=1 // pred_check
      _
    $region50: #{tpu_custom_call.1} parent=1 // pred_check_branch
      %234 = sbr.rel (0) target = $region52
    $region51: #{tpu_custom_call.1} parent=1 // pred_region
      %236 = vsyncadd [#allocation10], 0
      %s238 = sshll.u32 [#allocation11], 4
      %s239 = int_to_ptr.vmem [resolvable:$true] %s238
      %s240 = sshll.u32 %s8, 4
      %s241 = int_to_ptr.hbm [resolvable:$true] %s240
      %243 = dma.vmem_to_hbm [thread:$0]  %s239, 64, %s241, [#allocation10]
    $region52: #{tpu_custom_call.1} parent=1 // pred_fallthru
      _
    // Predicated region
    $region53: #{tpu_custom_call.1} parent=1 // pred_check
      _
    $region54: #{tpu_custom_call.1} parent=1 // pred_check_branch
      %245 = sbr.rel (0) target = $region56
    $region55: #{tpu_custom_call.1} parent=1 // pred_region
      %247 = dma.done [#allocation5], 512
    $region56: #{tpu_custom_call.1} parent=1 // pred_fallthru
      _
    // Predicated region
    $region57: #{tpu_custom_call.1} parent=1 // pred_check
      _
    $region58: #{tpu_custom_call.1} parent=1 // pred_check_branch
      %249 = sbr.rel (0) target = $region60
    $region59: #{tpu_custom_call.1} parent=1 // pred_region
      %251 = dma.done [#allocation10], 64
    $region60: #{tpu_custom_call.1} parent=1 // pred_fallthru
      _
    // Predicated region
    $region61: #{tpu_custom_call.1} parent=1 // pred_check
      _
    $region62: #{tpu_custom_call.1} parent=1 // pred_check_branch
      %253 = sbr.rel (0) target = $region64
    $region63: #{tpu_custom_call.1} parent=1 // pred_region
      %255 = dma.done [#allocation10], 64
    $region64: #{tpu_custom_call.1} parent=1 // pred_fallthru
      _
    %256 = vsyncpa [#allocation4], 1
    %257 = vsyncpa [#allocation7], 1
    %258 = vsyncpa [#allocation5], 1
    %259 = vsyncpa [#allocation10], 1

</llo_original>
